<compile_context>
chip_gen: v5e
topology: v5e:2x2
jax: 0.10.0
libtpu: 0.0.40
codegen_flags: <defaults>
</compile_context>

<pallas_src>
import functools

import jax
import jax.numpy as jnp
from jax import lax
from jax.experimental import pallas as pl
from jax.experimental.pallas import tpu as pltpu


def _cdiv(a, b):
    return -(-a // b)


def _round_up(x, m):
    return _cdiv(x, m) * m


# ----------------------------------------------------------------------------
# pltpu.roll direction probe (defensive: the kernel math only needs to know
# whether pltpu.roll matches jnp.roll; __main__ probes it once on-device).
# ----------------------------------------------------------------------------
def _roll_probe_kernel(x_ref, o_ref):
    o_ref[...] = pltpu.roll(x_ref[...], 1, axis=1)


@functools.lru_cache(maxsize=1)
def _roll_matches_jnp():
    x = jnp.broadcast_to(jnp.arange(256, dtype=jnp.float32), (8, 256))
    rolled = pl.pallas_call(
        _roll_probe_kernel,
        out_shape=jax.ShapeDtypeStruct((8, 256), jnp.float32),
    )(x)
    rolled = jax.device_get(rolled)
    fwd = jax.device_get(jnp.roll(x, 1, axis=1))
    return bool((rolled == fwd).all())


# ----------------------------------------------------------------------------
# Kernel
# ----------------------------------------------------------------------------
def _dwconv1d_kernel(x_ref, xp_ref, xn_ref, w_ref, b_ref, o_ref, *,
                     K, pad_l, t_in, t_t, W, n_sub, g, n_cg, mask_cur,
                     roll_matches_jnp):
    """One (batch, channel-tile, time-tile) block of the depthwise conv.

    x_ref  : (1, c_t, t_t)  current input time tile
    xp_ref : (1, c_t, 128)  the 128 input columns just left of this tile
    xn_ref : (1, c_t, 128)  the 128 input columns just right of this tile
    w_ref  : (c_t, K)       per-channel taps
    b_ref  : (c_t, 1)       per-channel bias
    o_ref  : (1, c_t, t_t)  output tile

    Output column J (global) = bias + sum_k w[k] * x[J + k - pad_l], with x
    read as zero outside [0, t_in).  This is exactly F.pad + valid conv for
    any (pad_l, pad_r), so no wrapper pad / post-slice is needed.
    """
    f32 = jnp.float32
    t = pl.program_id(2)
    j0 = t * t_t                                   # global col of o_ref[..., 0]
    lane128 = lax.broadcasted_iota(jnp.int32, (g, 128), 1)

    for cg in range(n_cg):                         # static channel groups
        rs = slice(cg * g, (cg + 1) * g)
        w_g = w_ref[rs, :].astype(f32)             # (g, K)   cast once
        b_g = b_ref[rs, :].astype(f32)             # (g, 1)

        # Neighbour halos, masked so columns outside [0, t_in) read as zero:
        # this realises F.pad's left / right zero padding fully in-kernel.
        p_col = (j0 - 128) + lane128
        prev_g = jnp.where((p_col >= 0) & (p_col < t_in),
                           xp_ref[0, rs, :].astype(f32), 0.0)
        n_col = (j0 + t_t) + lane128
        next_g = jnp.where(n_col < t_in, xn_ref[0, rs, :].astype(f32), 0.0)

        for si in range(n_sub):                    # static lane sub-blocks
            c0 = si * W
            ws = min(W, t_t - c0)                  # output width of this block
            lo = 0 if si == 0 else c0 - 128
            hi = t_t if si == n_sub - 1 else c0 + ws + 128
            cur = x_ref[0, rs, lo:hi].astype(f32)  # one load + one f32 cast
            if mask_cur:
                # Zero any column at/after the real input length (right pad /
                # partial edge block) so garbage never enters the MACs.
                col = (j0 + lo) + lax.broadcasted_iota(
                    jnp.int32, (g, hi - lo), 1)
                cur = jnp.where(col < t_in, cur, 0.0)

            pieces = ([prev_g] if si == 0 else []) + [cur] + \
                     ([next_g] if si == n_sub - 1 else [])
            win = pieces[0] if len(pieces) == 1 else jnp.concatenate(
                pieces, axis=-1)
            # win[:, i] == x_global[j0 + c0 - 128 + i], zero where padded/OOB.
            wd = ws + 256                          # window width

            acc = jnp.broadcast_to(b_g, (g, ws))   # bias-initialised f32 acc
            for k in range(K):
                s = pad_l - k                      # +ve: look back, -ve: ahead
                off = 128 - s                      # want src[:, j] = win[:, j + off]
                shift = (-off) % wd if roll_matches_jnp else off % wd
                src = pltpu.roll(win, shift, axis=1) if shift else win
                # Columns [0, ws) of src never hit the circular wrap (|s|<128,
                # 128-wide halos), so no merge/select is needed here.
                acc = acc + w_g[:, k:k + 1] * src[:, :ws]
            o_ref[0, rs, c0:c0 + ws] = acc.astype(o_ref.dtype)


# ----------------------------------------------------------------------------
# Wrapper
# ----------------------------------------------------------------------------
def depthwise_conv1d(x, weight, bias, padding, *, t_tile=None, c_tile=None,
                     lane_block=1024, roll_matches_jnp=True):
    """x: (B, C, T); weight: (C, 1, K) torch depthwise weight; bias: (C,).

    padding = (pad_left, pad_right) applied to the time axis (as F.pad does).
    Returns (B, C, T_out) with T_out = T + pad_left + pad_right - K + 1.
    """
    B, C, T_in = x.shape
    K = weight.shape[-1]
    pad_l, pad_r = padding
    T_out = T_in + pad_l + pad_r - (K - 1)
    assert T_out >= 1, "empty output"
    # One 128-wide halo block per side covers every tap's reach.
    # TODO(synk): pad_l > 127 or K-1-pad_l > 127 would need wider halos
    # (never the case for Conformer kernels, K <= 32).
    assert 0 <= pad_l <= 127 and max(0, K - 1 - pad_l) <= 127

    # ---- channel tile (sublane axis) ----
    if c_tile is not None:
        assert c_tile == C or c_tile % 8 == 0, "c_tile must be C or a multiple of 8"
        c_t = min(c_tile, C)
    else:
        c_t = C if C <= 64 else 64

    # ---- time tile (lane axis): multiple of 128; processed inside the kernel
    #      in <= lane_block wide register-resident sub-blocks ----
    if t_tile is not None:
        assert t_tile >= 128 and t_tile % 128 == 0, "t_tile must be a multiple of 128"
        t_t = t_tile
    else:
        nt_guess = max(1, _cdiv(T_out, 4096))
        t_t = _round_up(_cdiv(T_out, nt_guess), 128)
    assert lane_block >= 128 and lane_block % 128 == 0
    W = min(lane_block, t_t)
    n_sub = _cdiv(t_t, W)

    nt = _cdiv(T_out, t_t)
    nc = _cdiv(C, c_t)
    # v7x has two TensorCores sharding the "parallel" grid axes: make sure the
    # parallel grid has >= 2 steps whenever the problem allows it.
    while B * nc * nt < 2 and c_t > 8:
        c_t = max(8, _round_up(c_t // 2, 8))
        nc = _cdiv(C, c_t)

    g = 8 if c_t % 8 == 0 else c_t                 # channel-group height
    n_cg = c_t // g
    nt_x = max(1, _cdiv(T_in, t_t))                # x blocks of width t_t
    n128 = max(1, _cdiv(T_in, 128))                # x blocks of width 128
    r128 = t_t // 128
    mask_cur = (nt * t_t) > T_in                   # some tile can be partial

    w2d = weight.reshape(C, K)
    b2d = bias.reshape(C, 1)

    kernel = functools.partial(
        _dwconv1d_kernel, K=K, pad_l=pad_l, t_in=T_in, t_t=t_t, W=W,
        n_sub=n_sub, g=g, n_cg=n_cg, mask_cur=mask_cur,
        roll_matches_jnp=roll_matches_jnp)

    dsize = x.dtype.itemsize
    cost = pl.CostEstimate(
        flops=2 * K * B * C * T_out,
        transcendentals=0,
        bytes_accessed=B * C * (T_in + T_out) * dsize
        + C * (K + 1) * weight.dtype.itemsize)

    return pl.pallas_call(
        kernel,
        out_shape=jax.ShapeDtypeStruct((B, C, T_out), x.dtype),
        grid_spec=pltpu.PrefetchScalarGridSpec(
            num_scalar_prefetch=0,
            grid=(B, nc, nt),
            in_specs=[
                # Current time tile.  Block indices are clamped into the valid
                # range; any garbage this lets in is masked in-kernel using the
                # *unclamped* global column index.
                pl.BlockSpec((1, c_t, t_t),
                             lambda b, c, t: (b, c, jnp.minimum(t, nt_x - 1))),
                # 128 input columns just left of the tile (prev halo).
                pl.BlockSpec((1, c_t, 128),
                             lambda b, c, t: (b, c,
                                              jnp.clip(t * r128 - 1, 0, n128 - 1))),
                # 128 input columns just right of the tile (next halo).
                pl.BlockSpec((1, c_t, 128),
                             lambda b, c, t: (b, c,
                                              jnp.minimum((t + 1) * r128, n128 - 1))),
                pl.BlockSpec((c_t, K), lambda b, c, t: (c, 0)),
                pl.BlockSpec((c_t, 1), lambda b, c, t: (c, 0)),
            ],
            out_specs=pl.BlockSpec((1, c_t, t_t), lambda b, c, t: (b, c, t)),
        ),
        compiler_params=pltpu.CompilerParams(
            dimension_semantics=("parallel", "parallel", "parallel"),
            vmem_limit_bytes=32 * 1024 * 1024,
        ),
        cost_estimate=cost,
    )(x, x, x, w2d, b2d)


# ----------------------------------------------------------------------------
# Pure-JAX reference (F.pad + nn.Conv1d(groups=C))
# ----------------------------------------------------------------------------
def _reference_depthwise_conv1d(x, weight, bias, padding):
    C = x.shape[1]
    pad_l, pad_r = padding
    x_pad = jnp.pad(x, ((0, 0), (0, 0), (pad_l, pad_r)))
    out = lax.conv_general_dilated(
        x_pad, weight,
        window_strides=(1,),
        padding="VALID",
        dimension_numbers=("NCH", "OIH", "NCH"),
        feature_group_count=C,
        precision=lax.Precision.HIGHEST,
    )
    return out + bias[None, :, None]


if __name__ == "__main__":
    key = jax.random.PRNGKey(0)
    roll_dir_ok = _roll_matches_jnp()   # one-time on-device direction probe

    cases = [
        # (B, C, T, K, padding, forced t_tile)
        (2, 8, 16, 3, (2, 0), None),    # tiny causal-pad case, single tile
        (1, 16, 300, 7, (3, 3), 128),   # Conformer 'same' padding; multiple
                                        # time tiles exercise the prev/next
                                        # halos and the partial edge tile
        (1, 4, 40, 4, (2, 1), None),    # even kernel, asymmetric pad, C < 8
    ]

    for i, (B, C, T, K, padding, tt) in enumerate(cases):
        kx, kw_, kb = jax.random.split(jax.random.fold_in(key, i), 3)
        x = jax.random.normal(kx, (B, C, T), dtype=jnp.float32)
        # nn.Conv1d(C, C, K, groups=C): weight (C, 1, K), bias (C,)
        bound = 1.0 / (1 * K) ** 0.5
        weight = jax.random.uniform(kw_, (C, 1, K), jnp.float32, -bound, bound)
        bias = jax.random.uniform(kb, (C,), jnp.float32, -bound, bound)

        out = depthwise_conv1d(x, weight, bias, padding, t_tile=tt,
                               roll_matches_jnp=roll_dir_ok)
        out = jax.block_until_ready(out)

        ref = _reference_depthwise_conv1d(x, weight, bias, padding)
        assert out.shape == ref.shape, (i, out.shape, ref.shape)
        assert jnp.allclose(out, ref, atol=1e-5, rtol=1e-5), f"mismatch in case {i}"

    print("KERNEL_OK")
</pallas_src>

<mosaic_0001>
module attributes {stable_mosaic.version = 11 : i64} {
  func.func @_roll_probe_kernel(%arg0: memref<8x256xf32, #tpu.memory_space<vmem>>, %arg1: memref<8x256xf32, #tpu.memory_space<vmem>>) attributes {dimension_semantics = [], scalar_prefetch = 0 : i64, scratch_operands = 0 : i64, tpu.core_type = #tpu.core_type<tc>} {
    %c0 = arith.constant 0 : index
    %c0_0 = arith.constant 0 : index
    %0 = vector.load %arg0[%c0, %c0_0] : memref<8x256xf32, #tpu.memory_space<vmem>>, vector<8x256xf32>
    %c1_i32 = arith.constant 1 : i32
    %1 = tpu.dynamic_rotate %0 by %c1_i32 dim 1 : vector<8x256xf32>, i32 -> vector<8x256xf32>
    %c0_1 = arith.constant 0 : index
    %c0_2 = arith.constant 0 : index
    %2 = vector.load %arg1[%c0_1, %c0_2] : memref<8x256xf32, #tpu.memory_space<vmem>>, vector<8x256xf32>
    tpu.vector_store %arg1[%c0_1, %c0_2], %1 {strides = array<i32>} : memref<8x256xf32, #tpu.memory_space<vmem>>, vector<8x256xf32>,
    return
  }
}

</mosaic_0001>

<llo_original>
// kernel: tpu_custom_call.1
$region0: #{tpu_custom_call.1}
  #allocation0 [shape = 'u32[]', space=smem, size = 0x4, offset = 0x4, fixed_abs, tag = 'smem constant byte address 0x4 - core index']
  #allocation1 [shape = 'u32[72,128]{1,0:T(1,128)}', space=vmem, size = 0x9000, scoped, tag = 'internal scratch']
  %s0 = inlined_call_operand.hbm [shape: f32[8,256], index: 0, kind: input, shape index: {}]
  %s1 = inlined_call_operand.hbm [shape: f32[8,256], index: 1, kind: output, shape index: {}]
  %s2 = sld [smem:[#allocation0]]
  $region18: #{tpu_custom_call.1} parent=0
    _
  %s4 = ssub.s32 1, %s2
  %s5 = scalar_select 0, %s4, %s2
  $region1: #{tpu_custom_call.1} parent=0
    #allocation2 [shape = 'u8[8192]{0}', space=vmem, size = 0x2000, scoped, tag = 'input window, operand 0, single buffered']
    #allocation3 [shape = 's32[1]{0}', space=sflag, size = 0x4, scoped, tag = 'scoped memory for tpu_custom_call.1']
    #allocation4 [shape = 's32[1]{0}', space=sflag, size = 0x4, scoped, tag = 'scoped memory for tpu_custom_call.1']
    #allocation5 [shape = 'u8[8192]{0}', space=vmem, size = 0x2000, scoped, tag = 'output window, operand 0, single buffered']
    %6 = vsyncpa [#allocation3], 0
    %7 = vsyncpa [#allocation4], 0
    // Predicated region
    $region2: #{tpu_custom_call.1} parent=1 // pred_check
      _
    $region3: #{tpu_custom_call.1} parent=1 // pred_check_branch
      %9 = sbr.rel (0) target = $region5
    $region4: #{tpu_custom_call.1} parent=1 // pred_region
      %11 = vsyncadd [#allocation3], 0
      %s13 = sshll.u32 %s0, 4
      %s14 = int_to_ptr.hbm [resolvable:$true] %s13
      %s15 = sshll.u32 [#allocation2], 4
      %s16 = int_to_ptr.vmem [resolvable:$true] %s15
      %18 = dma.hbm_to_vmem [thread:$0]  %s14, 256, %s16, [#allocation3]
    $region5: #{tpu_custom_call.1} parent=1 // pred_fallthru
      _
    // Predicated region
    $region6: #{tpu_custom_call.1} parent=1 // pred_check
      _
    $region7: #{tpu_custom_call.1} parent=1 // pred_check_branch
      %20 = sbr.rel (0) target = $region9
    $region8: #{tpu_custom_call.1} parent=1 // pred_region
      %22 = dma.done [#allocation3], 256
    $region9: #{tpu_custom_call.1} parent=1 // pred_fallthru
      _
    %v23 = vld [vmem:[#allocation2] sm:$0xff]
    %v24 = vld [vmem:[#allocation2 + $0x8] sm:$0xff]
    %25 = vrot.lane.b32.xlu0 %v23, 1
    %v26 = vpop.permute.xlu0 %25
    %27 = vrot.lane.b32.xlu0 %v24, 1
    %v28 = vpop.permute.xlu0 %27
    %v29 = vlaneseq
    %v30 = vand.u32 %v29, 127
    %vm31 = vcmp.lt.s32.totalorder %v30, 1
    %v32 = vsel %vm31, %v26, %v28
    %v33 = vsel %vm31, %v28, %v26
    %34 = vst [vmem:[#allocation5] sm:$0xff] %v33
    %35 = vst [vmem:[#allocation5 + $0x8] sm:$0xff] %v32
    // Predicated region
    $region10: #{tpu_custom_call.1} parent=1 // pred_check
      _
    $region11: #{tpu_custom_call.1} parent=1 // pred_check_branch
      %37 = sbr.rel (0) target = $region13
    $region12: #{tpu_custom_call.1} parent=1 // pred_region
      %39 = vsyncadd [#allocation4], 0
      %s41 = sshll.u32 [#allocation5], 4
      %s42 = int_to_ptr.vmem [resolvable:$true] %s41
      %s43 = sshll.u32 %s1, 4
      %s44 = int_to_ptr.hbm [resolvable:$true] %s43
      %46 = dma.vmem_to_hbm [thread:$0]  %s42, 256, %s44, [#allocation4]
    $region13: #{tpu_custom_call.1} parent=1 // pred_fallthru
      _
    // Predicated region
    $region14: #{tpu_custom_call.1} parent=1 // pred_check
      _
    $region15: #{tpu_custom_call.1} parent=1 // pred_check_branch
      %48 = sbr.rel (0) target = $region17
    $region16: #{tpu_custom_call.1} parent=1 // pred_region
      %50 = dma.done [#allocation4], 256
    $region17: #{tpu_custom_call.1} parent=1 // pred_fallthru
      _
    %51 = vsyncpa [#allocation3], 1
    %52 = vsyncpa [#allocation4], 1

</llo_original>
